<compile_context>
chip_gen: v7x
topology: tpu7x:2x2x1
jax: 0.10.0
libtpu: 0.0.40
codegen_flags: <defaults>
</compile_context>

<pallas_src>
import functools

import jax
import jax.numpy as jnp
from jax.experimental import pallas as pl
from jax.experimental.pallas import tpu as pltpu


LANE = 128


# --------------------------------------------------------------------------
# small helpers (host-side, pure layout glue)
# --------------------------------------------------------------------------
def _round_up(x, m):
    return (x + m - 1) // m * m


def _pad_last(a, n):
    pad = n - a.shape[-1]
    if pad == 0:
        return a
    widths = [(0, 0)] * (a.ndim - 1) + [(0, pad)]
    return jnp.pad(a, widths)


def _pick_tile(p, d, e_pad):
    """Patch-row tile: full P per grid step unless the working set is huge.

    Budget ~12 MiB keeps headroom under the v5e 16 MiB scoped-VMEM default;
    on v6e/v7x the constraint is step overhead / HBM BW, not VMEM, so bigger
    is always better.
    """
    budget = 12 * 1024 * 1024
    per_row = 2 * 2 * d + 4 * e_pad          # 2x bf16 patch buffers + f32 emb
    max_rows = max(16, budget // per_row)
    if p <= max_rows:
        return p                              # one grid step per image
    best = p                                  # fall back to full extent
    for t in range(16, int(max_rows) + 1, 16):
        if p % t == 0:
            best = t                          # largest multiple-of-16 divisor
    return best


# --------------------------------------------------------------------------
# RIDRes channel interleave — fused into patchify (no standalone kernel).
# out[:, 2c] = rgb[:, c], out[:, 2c+1] = res[:, c]   (chunk/zip/cat semantics)
# --------------------------------------------------------------------------
def interleave_channels(x_res, x_rgb):
    B, C, H, W = x_rgb.shape
    return jnp.stack([x_rgb, x_res], axis=2).reshape(B, 2 * C, H, W)


# --------------------------------------------------------------------------
# Net kernel: patch-embed matmul (bf16 MXU, f32 accumulation) + LayerNorm +
# streaming global-average-pool.  Classifier head runs in XLA afterwards.
# --------------------------------------------------------------------------
def _net_kernel(patches_ref, w_emb_ref, b_emb_ref, gamma_ref, beta_ref,
                out_ref, acc_ref, *, inv_e, inv_p):
    pt = pl.program_id(1)

    @pl.when(pt == 0)
    def _():
        acc_ref[...] = jnp.zeros_like(acc_ref)

    x = patches_ref[0]                                       # (TILE_P, D) bf16
    emb = jnp.dot(x, w_emb_ref[...],
                  preferred_element_type=jnp.float32)        # (TILE_P, E_pad) f32
    emb = emb + b_emb_ref[...]                               # padded lanes stay 0

    # One-pass LayerNorm statistics over the TRUE embed dim (padded lanes = 0).
    s1 = jnp.sum(emb, axis=-1, keepdims=True)
    s2 = jnp.sum(emb * emb, axis=-1, keepdims=True)
    mu = s1 * inv_e
    var = jnp.maximum(s2 * inv_e - mu * mu, 0.0)
    emb = (emb - mu) * jax.lax.rsqrt(var + 1e-5)
    emb = emb * gamma_ref[...] + beta_ref[...]               # padded lanes -> 0

    # streaming global-average-pool accumulation (no in-kernel reshape)
    acc_ref[...] += jnp.sum(emb, axis=0, keepdims=True)      # (1, E_pad)

    @pl.when(pt == pl.num_programs(1) - 1)
    def _():
        out_ref[0] = acc_ref[...] * inv_p                    # (1, E_pad)


def net_forward(x, params, patch_size=4):
    """Stand-in for self.net(x).  x is NCHW (f32 or bf16)."""
    B, C, H, W = x.shape
    p = patch_size
    hp, wp = H // p, W // p
    P = hp * wp
    w_emb, b_emb, gamma, beta, w_head, b_head = params
    D = C * p * p
    E = w_emb.shape[1]

    E_pad = _round_up(E, LANE)

    # bf16 BEFORE the im2col transpose: halves the bytes of the HBM copy XLA
    # emits for this rearrangement.  No D padding of the activation.
    xb = x.astype(jnp.bfloat16)
    patches = (
        xb.reshape(B, C, hp, p, wp, p)
          .transpose(0, 2, 4, 1, 3, 5)
          .reshape(B, P, D)
    )

    # Only weights / LN params are lane-padded; zero padding keeps LN stats
    # and the pooled embedding exact (padded lanes end up identically zero).
    w_emb_p = _pad_last(w_emb, E_pad).astype(jnp.bfloat16)   # (D, E_pad)
    b_emb_p = _pad_last(b_emb, E_pad)
    gamma_p = _pad_last(gamma, E_pad)
    beta_p = _pad_last(beta, E_pad)

    TILE_P = _pick_tile(P, D, E_pad)          # full P per step in common cases
    n_pt = P // TILE_P

    kernel = functools.partial(_net_kernel, inv_e=1.0 / E, inv_p=1.0 / P)

    flops = 2.0 * B * P * D * E_pad
    bytes_accessed = (
        B * P * D * 2 + D * E_pad * 2          # patches + w_emb (bf16)
        + 3 * E_pad * 4                        # LN params / bias
        + B * E_pad * 4                        # pooled output
    )

    pooled = pl.pallas_call(
        kernel,
        out_shape=jax.ShapeDtypeStruct((B, 1, E_pad), jnp.float32),
        grid_spec=pltpu.PrefetchScalarGridSpec(
            num_scalar_prefetch=0,
            grid=(B, n_pt),
            in_specs=[
                # streamed, double-buffered patch tiles (full P per step when
                # n_pt == 1); last dim is the TRUE D (full-extent, no pad).
                pl.BlockSpec((1, TILE_P, D), lambda b, pt: (b, pt, 0)),
                # resident weights / LN params (constant index_map -> no re-DMA)
                pl.BlockSpec((D, E_pad), lambda b, pt: (0, 0)),
                pl.BlockSpec((1, E_pad), lambda b, pt: (0, 0)),
                pl.BlockSpec((1, E_pad), lambda b, pt: (0, 0)),
                pl.BlockSpec((1, E_pad), lambda b, pt: (0, 0)),
            ],
            out_specs=pl.BlockSpec((1, 1, E_pad), lambda b, pt: (b, 0, 0)),
            scratch_shapes=[pltpu.VMEM((1, E_pad), jnp.float32)],
        ),
        compiler_params=pltpu.CompilerParams(
            dimension_semantics=("parallel", "arbitrary"),
            vmem_limit_bytes=32 * 1024 * 1024),
        cost_estimate=pl.CostEstimate(
            flops=int(flops),
            transcendentals=int(B * P),
            bytes_accessed=int(bytes_accessed)),
    )(patches, w_emb_p, b_emb_p, gamma_p, beta_p)

    pooled = pooled.reshape(B, E_pad)[:, :E]                  # f32 (B, E)
    # classifier head: one batched (B,E)x(E,N) matmul in XLA (f32)
    return pooled @ w_head + b_head


# --------------------------------------------------------------------------
# Detector-equivalent wrappers
# --------------------------------------------------------------------------
def detector_forward(x, params):
    return net_forward(x, params)


def detector_forward_ridres(x_res, x_rgb, params):
    # bf16 before the stack so the interleave + im2col copies move half the
    # bytes; the stack/reshape fuses with the patchify transpose in XLA.
    x = interleave_channels(x_res.astype(jnp.bfloat16),
                            x_rgb.astype(jnp.bfloat16))
    return net_forward(x, params)


def init_params(key, in_chans, patch_size, embed_dim, num_classes):
    d = in_chans * patch_size * patch_size
    k1, k2, k3, k4 = jax.random.split(key, 4)
    w_emb = jax.random.normal(k1, (d, embed_dim), jnp.float32) * 0.02
    b_emb = jax.random.normal(k2, (1, embed_dim), jnp.float32) * 0.02
    gamma = jnp.ones((1, embed_dim), jnp.float32)
    beta = jnp.zeros((1, embed_dim), jnp.float32)
    w_head = jax.random.normal(k3, (embed_dim, num_classes), jnp.float32) * 0.02
    b_head = jax.random.normal(k4, (1, num_classes), jnp.float32) * 0.02
    return (w_emb, b_emb, gamma, beta, w_head, b_head)


# --------------------------------------------------------------------------
# pure-JAX reference (f32) for correctness checking
# --------------------------------------------------------------------------
def _net_reference(x, params, patch_size=4):
    B, C, H, W = x.shape
    p = patch_size
    hp, wp = H // p, W // p
    w_emb, b_emb, gamma, beta, w_head, b_head = params
    patches = (x.reshape(B, C, hp, p, wp, p)
                 .transpose(0, 2, 4, 1, 3, 5)
                 .reshape(B, hp * wp, C * p * p))
    emb = patches @ w_emb + b_emb
    mu = emb.mean(-1, keepdims=True)
    var = ((emb - mu) ** 2).mean(-1, keepdims=True)
    emb = (emb - mu) * jax.lax.rsqrt(var + 1e-5) * gamma + beta
    pooled = emb.mean(axis=1)
    return pooled @ w_head + b_head


if __name__ == "__main__":
    key = jax.random.PRNGKey(0)
    kx, kr, kp = jax.random.split(key, 3)

    B, C, H, W = 2, 4, 16, 16         # small test shapes
    patch_size, embed_dim, num_classes = 4, 32, 10
    in_chans = 2 * C                   # RIDRes interleaving doubles channels

    x_rgb = jax.random.normal(kx, (B, C, H, W), jnp.float32)
    x_res = jax.random.normal(kr, (B, C, H, W), jnp.float32)
    params = init_params(kp, in_chans, patch_size, embed_dim, num_classes)

    # interleave semantics check vs explicit torch.chunk/zip/cat equivalent
    chunks_rgb = [x_rgb[:, c:c + 1] for c in range(C)]
    chunks_res = [x_res[:, c:c + 1] for c in range(C)]
    inter_ref = jnp.concatenate(
        [ch for pair in zip(chunks_rgb, chunks_res) for ch in pair], axis=1)
    assert jnp.array_equal(interleave_channels(x_res, x_rgb), inter_ref), \
        "interleave mismatch"

    # forward (x already has the net's expected channel count)
    x = jax.random.normal(key, (B, in_chans, H, W), jnp.float32)
    out_fwd = detector_forward(x, params)
    ref_fwd = _net_reference(x, params, patch_size)

    # forward_RIDRes
    out_rid = detector_forward_ridres(x_res, x_rgb, params)
    ref_rid = _net_reference(inter_ref, params, patch_size)

    jax.block_until_ready((out_fwd, out_rid))
    assert out_fwd.shape == (B, num_classes)
    assert out_rid.shape == (B, num_classes)
    # bf16 MXU operands -> loose tolerance vs f32 reference
    assert float(jnp.max(jnp.abs(out_fwd - ref_fwd))) < 1e-2, "forward mismatch"
    assert float(jnp.max(jnp.abs(out_rid - ref_rid))) < 1e-2, "RIDRes mismatch"
    print("KERNEL_OK")
</pallas_src>

<mosaic_0001>
module attributes {stable_mosaic.version = 11 : i64} {
  func.func @_net_kernel(%arg0: i32, %arg1: i32, %arg2: memref<1x16x128xbf16, #tpu.memory_space<vmem>>, %arg3: memref<128x128xbf16, #tpu.memory_space<vmem>>, %arg4: memref<1x128xf32, #tpu.memory_space<vmem>>, %arg5: memref<1x128xf32, #tpu.memory_space<vmem>>, %arg6: memref<1x128xf32, #tpu.memory_space<vmem>>, %arg7: memref<1x1x128xf32, #tpu.memory_space<vmem>>, %arg8: memref<1x128xf32, #tpu.memory_space<vmem>>) attributes {dimension_semantics = [#tpu.dimension_semantics<parallel>, #tpu.dimension_semantics<arbitrary>], iteration_bounds = array<i64: 2, 1>, scalar_prefetch = 0 : i64, scratch_operands = 1 : i64, tpu.core_type = #tpu.core_type<tc>, window_params = [{transform_indices = @transform_0, window_bounds = array<i64: 1, 16, 128>}, {pipeline_mode = #tpu.pipeline_mode<synchronous>, transform_indices = @transform_1, window_bounds = array<i64: 128, 128>}, {pipeline_mode = #tpu.pipeline_mode<synchronous>, transform_indices = @transform_2, window_bounds = array<i64: 1, 128>}, {pipeline_mode = #tpu.pipeline_mode<synchronous>, transform_indices = @transform_3, window_bounds = array<i64: 1, 128>}, {pipeline_mode = #tpu.pipeline_mode<synchronous>, transform_indices = @transform_4, window_bounds = array<i64: 1, 128>}, {transform_indices = @transform_5, window_bounds = array<i64: 1, 1, 128>}]} {
    %c0_i32 = arith.constant 0 : i32
    %0 = arith.cmpi eq, %arg1, %c0_i32 : i32
    %1 = arith.extui %0 : i1 to i32
    %c0_i32_0 = arith.constant 0 : i32
    %2 = arith.cmpi ne, %1, %c0_i32_0 : i32
    scf.if %2 {
      %cst_24 = arith.constant 0.000000e+00 : f32
      %44 = vector.broadcast %cst_24 : f32 to vector<1x128xf32>
      %c0_25 = arith.constant 0 : index
      %c0_26 = arith.constant 0 : index
      %45 = vector.load %arg8[%c0_25, %c0_26] : memref<1x128xf32, #tpu.memory_space<vmem>>, vector<1x128xf32>
      tpu.vector_store %arg8[%c0_25, %c0_26], %44 {strides = array<i32>} : memref<1x128xf32, #tpu.memory_space<vmem>>, vector<1x128xf32>,
    } else {
    }
    %c0 = arith.constant 0 : index
    %c0_1 = arith.constant 0 : index
    %c0_2 = arith.constant 0 : index
    %3 = vector.load %arg2[%c0, %c0_1, %c0_2] : memref<1x16x128xbf16, #tpu.memory_space<vmem>>, vector<1x16x128xbf16>
    %4 = vector.shape_cast %3 : vector<1x16x128xbf16> to vector<16x128xbf16>
    %c0_3 = arith.constant 0 : index
    %c0_4 = arith.constant 0 : index
    %5 = vector.load %arg3[%c0_3, %c0_4] : memref<128x128xbf16, #tpu.memory_space<vmem>>, vector<128x128xbf16>
    %cst = arith.constant dense<0.000000e+00> : vector<16x128xf32>
    %6 = tpu.matmul %4, %5, %cst {dimension_numbers = #tpu.dot_dimension_numbers<[1], [0], [0], [1], [0, 0, 1, 1], [], []>} : vector<16x128xbf16>, vector<128x128xbf16>, vector<16x128xf32> -> vector<16x128xf32>
    %c0_5 = arith.constant 0 : index
    %c0_6 = arith.constant 0 : index
    %7 = vector.load %arg4[%c0_5, %c0_6] : memref<1x128xf32, #tpu.memory_space<vmem>>, vector<1x128xf32>
    %8 = vector.broadcast %7 : vector<1x128xf32> to vector<16x128xf32>
    %9 = arith.addf %6, %8 : vector<16x128xf32>
    %cst_7 = arith.constant dense<0.000000e+00> : vector<16xf32>
    %10 = vector.multi_reduction <add>, %9, %cst_7 [1] : vector<16x128xf32> to vector<16xf32>
    %11 = vector.shape_cast %10 : vector<16xf32> to vector<16x1xf32>
    %12 = arith.mulf %9, %9 : vector<16x128xf32>
    %cst_8 = arith.constant dense<0.000000e+00> : vector<16xf32>
    %13 = vector.multi_reduction <add>, %12, %cst_8 [1] : vector<16x128xf32> to vector<16xf32>
    %14 = vector.shape_cast %13 : vector<16xf32> to vector<16x1xf32>
    %cst_9 = arith.constant 3.125000e-02 : f32
    %15 = vector.broadcast %cst_9 : f32 to vector<16x1xf32>
    %16 = arith.mulf %11, %15 : vector<16x1xf32>
    %cst_10 = arith.constant 3.125000e-02 : f32
    %17 = vector.broadcast %cst_10 : f32 to vector<16x1xf32>
    %18 = arith.mulf %14, %17 : vector<16x1xf32>
    %19 = arith.mulf %16, %16 : vector<16x1xf32>
    %20 = arith.subf %18, %19 : vector<16x1xf32>
    %cst_11 = arith.constant 0.000000e+00 : f32
    %21 = vector.broadcast %cst_11 : f32 to vector<16x1xf32>
    %22 = arith.maximumf %20, %21 : vector<16x1xf32>
    %23 = vector.broadcast %16 : vector<16x1xf32> to vector<16x128xf32>
    %24 = arith.subf %9, %23 : vector<16x128xf32>
    %cst_12 = arith.constant 9.99999974E-6 : f32
    %25 = vector.broadcast %cst_12 : f32 to vector<16x1xf32>
    %26 = arith.addf %22, %25 : vector<16x1xf32>
    %27 = math.rsqrt %26 : vector<16x1xf32>
    %28 = vector.broadcast %27 : vector<16x1xf32> to vector<16x128xf32>
    %29 = arith.mulf %24, %28 : vector<16x128xf32>
    %c0_13 = arith.constant 0 : index
    %c0_14 = arith.constant 0 : index
    %30 = vector.load %arg5[%c0_13, %c0_14] : memref<1x128xf32, #tpu.memory_space<vmem>>, vector<1x128xf32>
    %31 = vector.broadcast %30 : vector<1x128xf32> to vector<16x128xf32>
    %32 = arith.mulf %29, %31 : vector<16x128xf32>
    %c0_15 = arith.constant 0 : index
    %c0_16 = arith.constant 0 : index
    %33 = vector.load %arg6[%c0_15, %c0_16] : memref<1x128xf32, #tpu.memory_space<vmem>>, vector<1x128xf32>
    %34 = vector.broadcast %33 : vector<1x128xf32> to vector<16x128xf32>
    %35 = arith.addf %32, %34 : vector<16x128xf32>
    %c0_17 = arith.constant 0 : index
    %c0_18 = arith.constant 0 : index
    %36 = vector.load %arg8[%c0_17, %c0_18] : memref<1x128xf32, #tpu.memory_space<vmem>>, vector<1x128xf32>
    %cst_19 = arith.constant dense<0.000000e+00> : vector<128xf32>
    %37 = vector.multi_reduction <add>, %35, %cst_19 [0] : vector<16x128xf32> to vector<128xf32>
    %38 = vector.shape_cast %37 : vector<128xf32> to vector<1x128xf32>
    %39 = arith.addf %36, %38 : vector<1x128xf32>
    %c0_20 = arith.constant 0 : index
    %c0_21 = arith.constant 0 : index
    %40 = vector.load %arg8[%c0_20, %c0_21] : memref<1x128xf32, #tpu.memory_space<vmem>>, vector<1x128xf32>
    tpu.vector_store %arg8[%c0_20, %c0_21], %39 {strides = array<i32>} : memref<1x128xf32, #tpu.memory_space<vmem>>, vector<1x128xf32>,
    %c0_i32_22 = arith.constant 0 : i32
    %41 = arith.cmpi eq, %arg1, %c0_i32_22 : i32
    %42 = arith.extui %41 : i1 to i32
    %c0_i32_23 = arith.constant 0 : i32
    %43 = arith.cmpi ne, %42, %c0_i32_23 : i32
    scf.if %43 {
      %c0_24 = arith.constant 0 : index
      %c0_25 = arith.constant 0 : index
      %44 = vector.load %arg8[%c0_24, %c0_25] : memref<1x128xf32, #tpu.memory_space<vmem>>, vector<1x128xf32>
      %cst_26 = arith.constant 6.250000e-02 : f32
      %45 = vector.broadcast %cst_26 : f32 to vector<1x128xf32>
      %46 = arith.mulf %44, %45 : vector<1x128xf32>
      %c0_27 = arith.constant 0 : index
      %c0_28 = arith.constant 0 : index
      %c0_29 = arith.constant 0 : index
      %47 = vector.load %arg7[%c0_27, %c0_28, %c0_29] : memref<1x1x128xf32, #tpu.memory_space<vmem>>, vector<1x1x128xf32>
      %48 = vector.shape_cast %47 : vector<1x1x128xf32> to vector<1x128xf32>
      %49 = vector.shape_cast %46 : vector<1x128xf32> to vector<1x1x128xf32>
      tpu.vector_store %arg7[%c0_27, %c0_28, %c0_29], %49 {strides = array<i32>} : memref<1x1x128xf32, #tpu.memory_space<vmem>>, vector<1x1x128xf32>,
    } else {
    }
    return
  }
  func.func @transform_0(%arg0: i32, %arg1: i32) -> (i32, i32, i32) {
    %c0_i32 = arith.constant 0 : i32
    %c0_i32_0 = arith.constant 0 : i32
    return %arg0, %arg1, %c0_i32 : i32, i32, i32
  }
  func.func @transform_1(%arg0: i32, %arg1: i32) -> (i32, i32) {
    %c0_i32 = arith.constant 0 : i32
    %c0_i32_0 = arith.constant 0 : i32
    %c0_i32_1 = arith.constant 0 : i32
    return %c0_i32, %c0_i32_0 : i32, i32
  }
  func.func @transform_2(%arg0: i32, %arg1: i32) -> (i32, i32) {
    %c0_i32 = arith.constant 0 : i32
    %c0_i32_0 = arith.constant 0 : i32
    %c0_i32_1 = arith.constant 0 : i32
    return %c0_i32, %c0_i32_0 : i32, i32
  }
  func.func @transform_3(%arg0: i32, %arg1: i32) -> (i32, i32) {
    %c0_i32 = arith.constant 0 : i32
    %c0_i32_0 = arith.constant 0 : i32
    %c0_i32_1 = arith.constant 0 : i32
    return %c0_i32, %c0_i32_0 : i32, i32
  }
  func.func @transform_4(%arg0: i32, %arg1: i32) -> (i32, i32) {
    %c0_i32 = arith.constant 0 : i32
    %c0_i32_0 = arith.constant 0 : i32
    %c0_i32_1 = arith.constant 0 : i32
    return %c0_i32, %c0_i32_0 : i32, i32
  }
  func.func @transform_5(%arg0: i32, %arg1: i32) -> (i32, i32, i32) {
    %c0_i32 = arith.constant 0 : i32
    %c0_i32_0 = arith.constant 0 : i32
    %c0_i32_1 = arith.constant 0 : i32
    return %arg0, %c0_i32, %c0_i32_0 : i32, i32, i32
  }
}

</mosaic_0001>

<llo_original>
// kernel: tpu_custom_call.1
$region0: #{tpu_custom_call.1}
  #allocation0 [shape = 'u32[]', space=smem, size = 0x4, offset = 0x4, fixed_abs, tag = 'smem constant byte address 0x4 - core index']
  #allocation1 [shape = 'u32[144,128]{1,0:T(1,128)}', space=vmem, size = 0x12000, scoped, tag = 'internal scratch']
  #allocation2 [shape = 'f32[1,128]{1,0:T(1,128)}', space=vmem, size = 0x200, scoped, tag = 'scratch operand']
  %s0 = inlined_call_operand.hbm [shape: bf16[2,16,128], index: 0, kind: input, shape index: {}]
  %s1 = inlined_call_operand.hbm [shape: bf16[128,128], index: 1, kind: input, shape index: {}]
  %s2 = inlined_call_operand.vmem [shape: f32[1,128], index: 2, kind: input, shape index: {}]
  %s3 = inlined_call_operand.vmem [shape: f32[1,128], index: 3, kind: input, shape index: {}]
  %s4 = inlined_call_operand.vmem [shape: f32[1,128], index: 4, kind: input, shape index: {}]
  %s5 = inlined_call_operand.hbm [shape: f32[2,1,128], index: 5, kind: output, shape index: {}]
  %s6 = sld [smem:[#allocation0]]
  $region69: #{tpu_custom_call.1} parent=0
    _
  %s8 = ssub.s32 1, %s6
  %s9 = scalar_select 0, %s8, %s6
  $region1: #{tpu_custom_call.1} parent=0
    #allocation3 [shape = 'u8[8192]{0}', space=vmem, size = 0x2000, scoped, tag = 'input window, operand 0']
    #allocation4 [shape = 's32[2]{0}', space=sflag, size = 0x8, scoped, tag = 'scoped memory for tpu_custom_call.1']
    #allocation5 [shape = 's32[2]{0}', space=sflag, size = 0x8, scoped, tag = 'scoped memory for tpu_custom_call.1']
    #allocation6 [shape = 'u8[32768]{0}', space=vmem, size = 0x8000, scoped, tag = 'input window, operand 1, single buffered']
    #allocation7 [shape = 's32[1]{0}', space=sflag, size = 0x4, scoped, tag = 'scoped memory for tpu_custom_call.1']
    #allocation8 [shape = 'u8[1024]{0}', space=vmem, size = 0x400, scoped, tag = 'output window, operand 0']
    %10 = vsyncpa [#allocation4], 0
    %s11 = scalar_lea.sflag [#allocation4], 1
    %12 = vsyncpa %s11, 0
    %13 = vsyncpa [#allocation7], 0
    %14 = vsyncpa [#allocation5], 0
    %s15 = scalar_lea.sflag [#allocation5], 1
    %16 = vsyncpa %s15, 0
    loop: start=0, step=1, limit=4
    $region2: #{tpu_custom_call.1} parent=1 // loop_pre_header
      _
    $region3: #{tpu_custom_call.1} parent=1 // loop_header
      %s18 = sphi 0, %s22
      %p19 = scmp.ge.s32.totalorder %s18, 4
      %s25 = sphi 0, %s37
      %s26 = sphi 0, %s33
      %s27 = sphi 0, %s25
      %s28 = sphi 0, %s26
      %s29 = sphi 0, %s27
      %s30 = sphi 0, %s28
      %s42 = sphi 0, %s44
      %s45 = sphi 0, %s42
      %s46 = sphi 0, %s45
      %s62 = sphi 0, %s46
      %s66 = sphi 0, %s66
      %s68 = sphi 0, %s66
      %s69 = sphi 0, %s68
      %s83 = sphi 0, %s69
      %s87 = sphi 0, %s87
      %s89 = sphi 0, %s87
      %s90 = sphi 0, %s89
      %s104 = sphi 0, %s90
      %s108 = sphi 0, %s108
      %s110 = sphi 0, %s108
      %s111 = sphi 0, %s110
      %s125 = sphi 0, %s111
      %s129 = sphi 0, %s129
      %s131 = sphi 0, %s129
      %s132 = sphi 0, %s131
      %s146 = sphi 0, %s132
      %s152 = sphi 0, %s154
      %s155 = sphi 0, %s152
      %s156 = sphi 0, %s155
      %s172 = sphi 0, %s156
    $region4: #{tpu_custom_call.1} parent=1 // loop_header_branch
      %21 = sbr.rel (%p19) target = $region8
    $region5: #{tpu_custom_call.1} parent=1 // loop_body
      %s23 = ssub.s32 %s18, 1
      %s24 = ssub.s32 %s18, 2
      %s31 = sadd.s32 1, %s26
      %p32 = scmp.ge.s32.totalorder %s31, 1
      %s33 = scalar_select %p32, 0, %s31
      %s34 = sadd.s32 1, %s25
      %s35 = scalar_select %p32, %s34, %s25
      %p36 = scmp.ge.s32.totalorder %s35, 2
      %s37 = scalar_select %p36, 0, %s35
      %s38 = ssub.s32 %s25, %s37
      %s39 = ssub.s32 %s26, %s33
      %s40 = sor.u32 %s38, %s39
      %p41 = scmp.eq.s32.totalorder %s40, 0
      %s43 = sadd.s32 %s42, 1
      %s44 = scalar_select %p41, %s42, %s43
      %p47 = pneg %p41
      %p48 = scmp.eq.s32.totalorder %s18, 1
      %p49 = por %p47, %p48
      %p50 = scmp.ne.s32.totalorder %s42, %s45
      %p51 = scmp.eq.s32.totalorder %s18, 0
      %p52 = por %p50, %p51
      %p53 = scmp.ne.s32.totalorder %s42, %s45
      %p54 = scmp.eq.s32.totalorder %s23, 1
      %p55 = por %p53, %p54
      %p56 = scmp.ne.s32.totalorder %s45, %s46
      %p57 = scmp.eq.s32.totalorder %s23, 0
      %p58 = por %p56, %p57
      %p59 = scmp.ne.s32.totalorder %s45, %s46
      %p60 = scmp.eq.s32.totalorder %s24, 1
      %p61 = por %p59, %p60
      %p63 = scmp.ne.s32.totalorder %s46, %s62
      %p64 = scmp.eq.s32.totalorder %s24, 0
      %p65 = por %p63, %p64
      %s67 = sadd.s32 %s66, 1
      %p70 = scmp.eq.s32.totalorder %s18, 1
      %p71 = scmp.ne.s32.totalorder %s66, %s68
      %p72 = scmp.eq.s32.totalorder %s18, 0
      %p73 = por %p71, %p72
      %p74 = scmp.ne.s32.totalorder %s66, %s68
      %p75 = scmp.eq.s32.totalorder %s23, 1
      %p76 = por %p74, %p75
      %p77 = scmp.ne.s32.totalorder %s68, %s69
      %p78 = scmp.eq.s32.totalorder %s23, 0
      %p79 = por %p77, %p78
      %p80 = scmp.ne.s32.totalorder %s68, %s69
      %p81 = scmp.eq.s32.totalorder %s24, 1
      %p82 = por %p80, %p81
      %p84 = scmp.ne.s32.totalorder %s69, %s83
      %p85 = scmp.eq.s32.totalorder %s24, 0
      %p86 = por %p84, %p85
      %s88 = sadd.s32 %s87, 1
      %p91 = scmp.eq.s32.totalorder %s18, 1
      %p92 = scmp.ne.s32.totalorder %s87, %s89
      %p93 = scmp.eq.s32.totalorder %s18, 0
      %p94 = por %p92, %p93
      %p95 = scmp.ne.s32.totalorder %s87, %s89
      %p96 = scmp.eq.s32.totalorder %s23, 1
      %p97 = por %p95, %p96
      %p98 = scmp.ne.s32.totalorder %s89, %s90
      %p99 = scmp.eq.s32.totalorder %s23, 0
      %p100 = por %p98, %p99
      %p101 = scmp.ne.s32.totalorder %s89, %s90
      %p102 = scmp.eq.s32.totalorder %s24, 1
      %p103 = por %p101, %p102
      %p105 = scmp.ne.s32.totalorder %s90, %s104
      %p106 = scmp.eq.s32.totalorder %s24, 0
      %p107 = por %p105, %p106
      %s109 = sadd.s32 %s108, 1
      %p112 = scmp.eq.s32.totalorder %s18, 1
      %p113 = scmp.ne.s32.totalorder %s108, %s110
      %p114 = scmp.eq.s32.totalorder %s18, 0
      %p115 = por %p113, %p114
      %p116 = scmp.ne.s32.totalorder %s108, %s110
      %p117 = scmp.eq.s32.totalorder %s23, 1
      %p118 = por %p116, %p117
      %p119 = scmp.ne.s32.totalorder %s110, %s111
      %p120 = scmp.eq.s32.totalorder %s23, 0
      %p121 = por %p119, %p120
      %p122 = scmp.ne.s32.totalorder %s110, %s111
      %p123 = scmp.eq.s32.totalorder %s24, 1
      %p124 = por %p122, %p123
      %p126 = scmp.ne.s32.totalorder %s111, %s125
      %p127 = scmp.eq.s32.totalorder %s24, 0
      %p128 = por %p126, %p127
      %s130 = sadd.s32 %s129, 1
      %p133 = scmp.eq.s32.totalorder %s18, 1
      %p134 = scmp.ne.s32.totalorder %s129, %s131
      %p135 = scmp.eq.s32.totalorder %s18, 0
      %p136 = por %p134, %p135
      %p137 = scmp.ne.s32.totalorder %s129, %s131
      %p138 = scmp.eq.s32.totalorder %s23, 1
      %p139 = por %p137, %p138
      %p140 = scmp.ne.s32.totalorder %s131, %s132
      %p141 = scmp.eq.s32.totalorder %s23, 0
      %p142 = por %p140, %p141
      %p143 = scmp.ne.s32.totalorder %s131, %s132
      %p144 = scmp.eq.s32.totalorder %s24, 1
      %p145 = por %p143, %p144
      %p147 = scmp.ne.s32.totalorder %s132, %s146
      %p148 = scmp.eq.s32.totalorder %s24, 0
      %p149 = por %p147, %p148
      %s150 = ssub.s32 %s25, %s37
      %p151 = scmp.eq.s32.totalorder %s150, 0
      %s153 = sadd.s32 %s152, 1
      %s154 = scalar_select %p151, %s152, %s153
      %p157 = pneg %p151
      %p158 = scmp.eq.s32.totalorder %s18, 1
      %p159 = por %p157, %p158
      %p160 = scmp.ne.s32.totalorder %s152, %s155
      %p161 = scmp.eq.s32.totalorder %s18, 0
      %p162 = por %p160, %p161
      %p163 = scmp.ne.s32.totalorder %s152, %s155
      %p164 = scmp.eq.s32.totalorder %s23, 1
      %p165 = por %p163, %p164
      %p166 = scmp.ne.s32.totalorder %s155, %s156
      %p167 = scmp.eq.s32.totalorder %s23, 0
      %p168 = por %p166, %p167
      %p169 = scmp.ne.s32.totalorder %s155, %s156
      %p170 = scmp.eq.s32.totalorder %s24, 1
      %p171 = por %p169, %p170
      %p173 = scmp.ne.s32.totalorder %s156, %s172
      %p174 = scmp.eq.s32.totalorder %s24, 0
      %p175 = por %p173, %p174
      %p176 = scmp.le.s32.totalorder 1, %s18
      %p177 = scmp.lt.s32.totalorder %s18, 3
      %p178 = pnand %p176, %p177
      %p179 = pneg %p178
      // Predicated region
      $region9: #{tpu_custom_call.1} parent=5 // pred_check
        _
      $region10: #{tpu_custom_call.1} parent=5 // pred_check_branch
        %181 = sbr.rel (%p178) target = $region12
      $region11: #{tpu_custom_call.1} parent=5 // pred_region
        %s182 = ssub.s32 %s18, 1
        // Predicated region
        $region13: #{tpu_custom_call.1} parent=11 // pred_check
          %p183 = pneg %p79
        $region14: #{tpu_custom_call.1} parent=11 // pred_check_branch
          %185 = sbr.rel (%p183) target = $region16
        $region15: #{tpu_custom_call.1} parent=11 // pred_region
          %s187 = ssub.s32 1024, 1024
          %188 = vsyncadd [#allocation7], %s187
          %s189 = sshll.u32 [#allocation6], 4
          %s190 = int_to_ptr.vmem [resolvable:$true] %s189
          %195 = dma.hbm_to_vmem [thread:$0]  %s1, 1024, %s190, [#allocation7], 64, 64, 4
        $region16: #{tpu_custom_call.1} parent=11 // pred_fallthru
          _
        // Predicated region
        $region17: #{tpu_custom_call.1} parent=11 // pred_check
          %p196 = pneg %p100
        $region18: #{tpu_custom_call.1} parent=11 // pred_check_branch
          %198 = sbr.rel (%p196) target = $region20
        $region19: #{tpu_custom_call.1} parent=11 // pred_region
          _
        $region20: #{tpu_custom_call.1} parent=11 // pred_fallthru
          _
        // Predicated region
        $region21: #{tpu_custom_call.1} parent=11 // pred_check
          %p199 = pneg %p121
        $region22: #{tpu_custom_call.1} parent=11 // pred_check_branch
          %201 = sbr.rel (%p199) target = $region24
        $region23: #{tpu_custom_call.1} parent=11 // pred_region
          _
        $region24: #{tpu_custom_call.1} parent=11 // pred_fallthru
          _
        // Predicated region
        $region25: #{tpu_custom_call.1} parent=11 // pred_check
          %p202 = pneg %p142
        $region26: #{tpu_custom_call.1} parent=11 // pred_check_branch
          %204 = sbr.rel (%p202) target = $region28
        $region27: #{tpu_custom_call.1} parent=11 // pred_region
          _
        $region28: #{tpu_custom_call.1} parent=11 // pred_fallthru
          _
      $region12: #{tpu_custom_call.1} parent=5 // pred_fallthru
        _
      %p205 = scmp.lt.s32.totalorder %s18, 2
      // Predicated region
      $region29: #{tpu_custom_call.1} parent=5 // pred_check
        %p206 = pneg %p205
      $region30: #{tpu_custom_call.1} parent=5 // pred_check_branch
        %208 = sbr.rel (%p206) target = $region32
      $region31: #{tpu_custom_call.1} parent=5 // pred_region
        // Predicated region
        $region33: #{tpu_custom_call.1} parent=31 // pred_check
          %p209 = pneg %p52
        $region34: #{tpu_custom_call.1} parent=31 // pred_check_branch
          %211 = sbr.rel (%p209) target = $region36
        $region35: #{tpu_custom_call.1} parent=31 // pred_region
          %s212 = sand.u32 %s42, 1
          %s213 = scalar_lea.sflag [#allocation4], %s212
          %s214 = sand.u32 %s42, 1
          %s215 = smul.addr %s214, 8
          %s216 = scalar_lea.vmem [#allocation3], %s215
          %s217 = smul.u32 2, %s26
          %s219 = ssub.s32 128, 128
          %220 = vsyncadd %s213, %s219
          %s221 = smul.addr %s25, 2
          %s222 = sadd.s32 %s217, %s221
          %s223 = smul.addr %s222, 64
          %s224 = scalar_lea.hbm %s0, %s223
          %s225 = sshll.u32 %s216, 4
          %s226 = int_to_ptr.vmem [resolvable:$true] %s225
          %231 = dma.hbm_to_vmem [thread:$0]  %s224, 128, %s226, %s213, 64, 64, 4
        $region36: #{tpu_custom_call.1} parent=31 // pred_fallthru
          _
      $region32: #{tpu_custom_call.1} parent=5 // pred_fallthru
        _
      %p232 = scmp.le.s32.totalorder 1, %s18
      %p233 = scmp.lt.s32.totalorder %s18, 3
      %p234 = pnand %p232, %p233
      %p235 = pneg %p234
      // Predicated region
      $region37: #{tpu_custom_call.1} parent=5 // pred_check
        _
      $region38: #{tpu_custom_call.1} parent=5 // pred_check_branch
        %237 = sbr.rel (%p234) target = $region40
      $region39: #{tpu_custom_call.1} parent=5 // pred_region
        %s238 = ssub.s32 %s18, 1
        %s239 = sand.u32 %s45, 1
        %s240 = scalar_lea.sflag [#allocation4], %s239
        %s241 = sand.u32 %s45, 1
        %s242 = smul.addr %s241, 8
        %s243 = scalar_lea.vmem [#allocation3], %s242
        // Predicated region
        $region41: #{tpu_custom_call.1} parent=39 // pred_check
          %p244 = pneg %p58
        $region42: #{tpu_custom_call.1} parent=39 // pred_check_branch
          %246 = sbr.rel (%p244) target = $region44
        $region43: #{tpu_custom_call.1} parent=39 // pred_region
          %247 = dma.done %s240, 128
        $region44: #{tpu_custom_call.1} parent=39 // pred_fallthru
          _
        // Predicated region
        $region45: #{tpu_custom_call.1} parent=39 // pred_check
          %p248 = pneg %p79
        $region46: #{tpu_custom_call.1} parent=39 // pred_check_branch
          %250 = sbr.rel (%p248) target = $region48
        $region47: #{tpu_custom_call.1} parent=39 // pred_region
          %251 = dma.done [#allocation7], 1024
        $region48: #{tpu_custom_call.1} parent=39 // pred_fallthru
          _
        %s252 = sand.u32 %s45, 1
        %s253 = scalar_lea.sflag [#allocation4], %s252
        %s254 = sand.u32 %s45, 1
        %s255 = smul.addr %s254, 8
        %s256 = scalar_lea.vmem [#allocation3], %s255
        %p257 = pneg %p58
        %p258 = pneg %p55
        %p259 = pneg %p79
        %p260 = pneg %p76
        %p261 = pneg %p100
        %p262 = pneg %p97
        %p263 = pneg %p121
        %p264 = pneg %p118
        %p265 = pneg %p142
        %p266 = pneg %p139
        %p267 = pneg %p168
        %p268 = pneg %p165
        %s269 = sand.u32 %s155, 1
        %s270 = scalar_lea.sflag [#allocation5], %s269
        %s271 = sand.u32 %s155, 1
        %s272 = scalar_lea.vmem [#allocation8], %s271
        %s273 = smul.u32 2, %s28
        %p275 = scmp.eq.s32.totalorder %s28, 0
        // Predicated region
        $region49: #{tpu_custom_call.1} parent=39 // pred_check
          %p276 = pneg %p275
        $region50: #{tpu_custom_call.1} parent=39 // pred_check_branch
          %278 = sbr.rel (%p276) target = $region52
        $region51: #{tpu_custom_call.1} parent=39 // pred_region
          %279 = vst [vmem:[#allocation2] sm:$0x1] 0.0
        $region52: #{tpu_custom_call.1} parent=39 // pred_fallthru
          _
        %v280 = vld [vmem:[%s243] sm:$0xf]
        %v281 = vld [vmem:[%s243 + $0x4] sm:$0xf]
        %v282 = vld [vmem:[#allocation6] sm:$0xf]
        %v283 = vld [vmem:[#allocation6 + $0x4] sm:$0xf]
        %v284 = vld [vmem:[#allocation6 + $0x8] sm:$0xf]
        %v285 = vld [vmem:[#allocation6 + $0xc] sm:$0xf]
        %v286 = vld [vmem:[#allocation6 + $0x10] sm:$0xf]
        %v287 = vld [vmem:[#allocation6 + $0x14] sm:$0xf]
        %v288 = vld [vmem:[#allocation6 + $0x18] sm:$0xf]
        %v289 = vld [vmem:[#allocation6 + $0x1c] sm:$0xf]
        %v290 = vld [vmem:[#allocation6 + $0x20] sm:$0xf]
        %v291 = vld [vmem:[#allocation6 + $0x24] sm:$0xf]
        %v292 = vld [vmem:[#allocation6 + $0x28] sm:$0xf]
        %v293 = vld [vmem:[#allocation6 + $0x2c] sm:$0xf]
        %v294 = vld [vmem:[#allocation6 + $0x30] sm:$0xf]
        %v295 = vld [vmem:[#allocation6 + $0x34] sm:$0xf]
        %v296 = vld [vmem:[#allocation6 + $0x38] sm:$0xf]
        %v297 = vld [vmem:[#allocation6 + $0x3c] sm:$0xf]
        %v298 = vld [vmem:[%s2] sm:$0x1]
        %v300 = vlaneseq
        %v301 = vshrl.u32 %v300, 7
        %v302 = vsub.s32 0, %v301
        %v303 = vrot.slane %v298, %v302
        %v307 = vunpack.c.l.b16 %v280
        %v308 = vunpack.c.l.b16 %v281
        %v309 = vpack.c.b16 %v308, %v307
        %v327 = vunpack.c.l.b16 %v282
        %v328 = vunpack.c.l.b16 %v283
        %v329 = vunpack.c.l.b16 %v284
        %v330 = vunpack.c.l.b16 %v285
        %v331 = vunpack.c.l.b16 %v286
        %v332 = vunpack.c.l.b16 %v287
        %v333 = vunpack.c.l.b16 %v288
        %v334 = vunpack.c.l.b16 %v289
        %v335 = vunpack.c.l.b16 %v290
        %v336 = vunpack.c.l.b16 %v291
        %v337 = vunpack.c.l.b16 %v292
        %v338 = vunpack.c.l.b16 %v293
        %v339 = vunpack.c.l.b16 %v294
        %v340 = vunpack.c.l.b16 %v295
        %v341 = vunpack.c.l.b16 %v296
        %v342 = vunpack.c.l.b16 %v297
        %v343 = vpack.c.b16 %v328, %v327
        %v344 = vpack.c.b16 %v330, %v329
        %v345 = vpack.c.b16 %v332, %v331
        %v346 = vpack.c.b16 %v334, %v333
        %v347 = vpack.c.b16 %v336, %v335
        %v348 = vpack.c.b16 %v338, %v337
        %v349 = vpack.c.b16 %v340, %v339
        %v350 = vpack.c.b16 %v342, %v341
        %359 = vmatprep.subr.bf16.mxu0 0
        %360 = vmatpush1.bf16.msra.mxu0 %v343
        %361 = vmatprep.subr.bf16.mxu0 0
        %362 = vmatpush1.bf16.msra.mxu0 %v344
        %363 = vmatprep.subr.bf16.mxu0 0
        %364 = vmatpush1.bf16.msra.mxu0 %v345
        %365 = vmatprep.subr.bf16.mxu0 0
        %366 = vmatpush1.bf16.msra.mxu0 %v346
        %367 = vmatprep.subr.bf16.mxu0 0
        %368 = vmatpush1.bf16.msra.mxu0 %v347
        %369 = vmatprep.subr.bf16.mxu0 0
        %370 = vmatpush1.bf16.msra.mxu0 %v348
        %371 = vmatprep.subr.bf16.mxu0 0
        %372 = vmatpush1.bf16.msra.mxu0 %v349
        %373 = vmatprep.subr.bf16.mxu0 0
        %374 = vmatpush1.bf16.msra.mxu0 %v350
        %375 = vmatprep.subr.bf16.mxu0 0
        %376 = vmatpush1.bf16.msra.mxu0 0
        %377 = vmatprep.subr.bf16.mxu0 0
        %378 = vmatpush1.bf16.msra.mxu0 0
        %379 = vmatprep.subr.bf16.mxu0 0
        %380 = vmatpush1.bf16.msra.mxu0 0
        %381 = vmatprep.subr.bf16.mxu0 0
        %382 = vmatpush1.bf16.msra.mxu0 0
        %383 = vmatprep.subr.bf16.mxu0 0
        %384 = vmatpush1.bf16.msra.mxu0 0
        %385 = vmatprep.subr.bf16.mxu0 0
        %386 = vmatpush1.bf16.msra.mxu0 0
        %387 = vmatprep.subr.bf16.mxu0 0
        %388 = vmatpush1.bf16.msra.mxu0 0
        %389 = vmatprep.subr.bf16.mxu0 0
        %390 = vmatpush1.bf16.msra.mxu0 0
        %391 = vmatprep.mubr.bf16.mxu0 0
        %392 = vmatmul.mubr.bf16.gmra.mrb[0].mxu0 %v309
        %v393 = vpop.f32.mrb[0].mxu0
        %v394 = vadd.f32 %v303, %v393
        %v395 = vpop.f32.mrb[0].mxu0
        %v396 = vpop.f32.mrb[0].mxu0
        %v397 = vadd.f32 %v303, %v396
        %v398 = vpop.f32.mrb[0].mxu0
        %399 = vdwg.mxu0
        %400 = vadd.xlane.f32.xlu0 %v394
        %v401 = vpop.xlane.xlu0 %400
        %402 = vadd.xlane.f32.xlu0 %v397
        %v403 = vpop.xlane.xlu0 %402
        %v404 = vmul.f32 %v394, %v394
        %v405 = vmul.f32 %v397, %v397
        %406 = vadd.xlane.f32.xlu0 %v404
        %v407 = vpop.xlane.xlu0 %406
        %408 = vadd.xlane.f32.xlu0 %v405
        %v409 = vpop.xlane.xlu0 %408
        %v410 = vmul.f32 %v401, 0.03125
        %v411 = vmul.f32 %v403, 0.03125
        %v412 = vmul.f32 %v407, 0.03125
        %v413 = vmul.f32 %v409, 0.03125
        %v414 = vmul.f32 %v410, %v410
        %v415 = vmul.f32 %v411, %v411
        %v416 = vsub.f32 %v412, %v414
        %v417 = vsub.f32 %v413, %v415
        %v418 = vmax.f32 %v416, 0.0
        %v419 = vmax.f32 %v417, 0.0
        %v420 = vsub.f32 %v394, %v410
        %v421 = vsub.f32 %v397, %v411
        %v422 = vadd.f32 %v418, 1e-05
        %v423 = vadd.f32 %v419, 1e-05
        %v424 = vrsqrt.pop %v422
        %v425 = vrsqrt.pop %v423
        %v426 = vmul.f32 %v420, %v424
        %v427 = vmul.f32 %v421, %v425
        %v428 = vld [vmem:[%s3] sm:$0x1]
        %v430 = vlaneseq
        %v431 = vshrl.u32 %v430, 7
        %v432 = vsub.s32 0, %v431
        %v433 = vrot.slane %v428, %v432
        %v435 = vmul.f32 %v426, %v433
        %v436 = vmul.f32 %v427, %v433
        %v437 = vld [vmem:[%s4] sm:$0x1]
        %v439 = vlaneseq
        %v440 = vshrl.u32 %v439, 7
        %v441 = vsub.s32 0, %v440
        %v442 = vrot.slane %v437, %v441
        %v444 = vadd.f32 %v435, %v442
        %v445 = vadd.f32 %v436, %v442
        %v446 = vld [vmem:[#allocation2] sm:$0x1]
        %v447 = vadd.f32 %v444, %v445
        %v448 = vrot.slane %v447, 4
        %v449 = vadd.f32 %v447, %v448
        %v450 = vrot.slane %v449, 2
        %v451 = vadd.f32 %v449, %v450
        %v452 = vrot.slane %v451, 1
        %v453 = vadd.f32 %v451, %v452
        %v454 = vadd.f32 %v446, %v453
        %455 = vst [vmem:[#allocation2] sm:$0x1] %v454
        // Predicated region
        $region53: #{tpu_custom_call.1} parent=39 // pred_check
          %p456 = pneg %p275
        $region54: #{tpu_custom_call.1} parent=39 // pred_check_branch
          %458 = sbr.rel (%p456) target = $region56
        $region55: #{tpu_custom_call.1} parent=39 // pred_region
          %v459 = vld [vmem:[#allocation2] sm:$0x1]
          %v460 = vmul.f32 %v459, 0.0625
          %461 = vst [vmem:[%s272] sm:$0x1] %v460
        $region56: #{tpu_custom_call.1} parent=39 // pred_fallthru
          _
        %s462 = sand.u32 %s155, 1
        %s463 = scalar_lea.sflag [#allocation5], %s462
        %s464 = sand.u32 %s155, 1
        %s465 = scalar_lea.vmem [#allocation8], %s464
        // Predicated region
        $region57: #{tpu_custom_call.1} parent=39 // pred_check
          %p466 = pneg %p165
        $region58: #{tpu_custom_call.1} parent=39 // pred_check_branch
          %468 = sbr.rel (%p466) target = $region60
        $region59: #{tpu_custom_call.1} parent=39 // pred_region
          %s470 = ssub.s32 16, 16
          %471 = vsyncadd %s463, %s470
          %s472 = smul.addr %s27, 16
          %s473 = scalar_lea.hbm %s5, %s472
          %s475 = sshll.u32 %s465, 4
          %s476 = int_to_ptr.vmem [resolvable:$true] %s475
          %478 = dma.vmem_to_hbm [thread:$0]  %s476, 16, %s473, %s463
        $region60: #{tpu_custom_call.1} parent=39 // pred_fallthru
          _
      $region40: #{tpu_custom_call.1} parent=5 // pred_fallthru
        _
      %p479 = scmp.le.s32.totalorder 2, %s18
      // Predicated region
      $region61: #{tpu_custom_call.1} parent=5 // pred_check
        %p480 = pneg %p479
      $region62: #{tpu_custom_call.1} parent=5 // pred_check_branch
        %482 = sbr.rel (%p480) target = $region64
      $region63: #{tpu_custom_call.1} parent=5 // pred_region
        %s483 = ssub.s32 %s18, 2
        // Predicated region
        $region65: #{tpu_custom_call.1} parent=63 // pred_check
          %p484 = pneg %p171
        $region66: #{tpu_custom_call.1} parent=63 // pred_check_branch
          %486 = sbr.rel (%p484) target = $region68
        $region67: #{tpu_custom_call.1} parent=63 // pred_region
          %s487 = sand.u32 %s156, 1
          %s488 = scalar_lea.sflag [#allocation5], %s487
          %s489 = sand.u32 %s156, 1
          %s490 = scalar_lea.vmem [#allocation8], %s489
          %491 = dma.done %s488, 16
        $region68: #{tpu_custom_call.1} parent=63 // pred_fallthru
          _
      $region64: #{tpu_custom_call.1} parent=5 // pred_fallthru
        _
    $region6: #{tpu_custom_call.1} parent=1 // loop_footer
      %s22 = sadd.s32 1, %s18
    $region7: #{tpu_custom_call.1} parent=1 // loop_footer_branch
      %17 = sbr.rel target = $region3
    $region8: #{tpu_custom_call.1} parent=1 // loop_exit
      _
    %492 = vsyncpa [#allocation4], 1
    %s493 = scalar_lea.sflag [#allocation4], 1
    %494 = vsyncpa %s493, 1
    %495 = vsyncpa [#allocation7], 1
    %496 = vsyncpa [#allocation5], 1
    %s497 = scalar_lea.sflag [#allocation5], 1
    %498 = vsyncpa %s497, 1

</llo_original>
